<compile_context>
chip_gen: v7x
topology: tpu7x:2x2x1
jax: 0.10.0
libtpu: 0.0.40
codegen_flags: <defaults>
</compile_context>

<pallas_src>
import jax
import jax.numpy as jnp
from jax.experimental import pallas as pl
from jax.experimental.pallas import tpu as pltpu


_PER_BUF_BUDGET = 12 * 1024 * 1024   # bytes per streamed activation buffer
_MAX_TILE_N = 2048                   # rows per tile upper bound
_TARGET_TILE_N = 512                 # rows we insist on before tiling D


def _round_up(v, m):
    return ((v + m - 1) // m) * m


def _choose_tiles(n, d, x_itemsize):
    """Pick (tile_n, tile_k) so 2 x-buffers fit comfortably in scoped VMEM."""
    sublane = 16 if x_itemsize == 2 else 8   # bf16 packs 16 rows per vreg
    if _TARGET_TILE_N * d * x_itemsize <= _PER_BUF_BUDGET:
        tile_k = d                           # full feature dim -> no K tiling
    else:
        tile_k = max(
            128,
            (_PER_BUF_BUDGET // (_TARGET_TILE_N * x_itemsize)) // 128 * 128,
        )
    tile_n = _PER_BUF_BUDGET // (tile_k * x_itemsize)
    tile_n = max(sublane, min(_MAX_TILE_N, tile_n) // sublane * sublane)
    tile_n = min(tile_n, _round_up(n, sublane))   # don't exceed the problem
    return tile_n, tile_k


def _ccs_probe_kernel(x_ref, w_ref, b_ref, o_ref, acc_ref):
    # x_ref: (tile_n, tile_k), w_ref: (tile_k, 1), b_ref: (1, 1) in SMEM,
    # o_ref: (tile_n, 1), acc_ref: (tile_n, 1) f32 scratch.
    k = pl.program_id(1)

    @pl.when(k == 0)
    def _():
        acc_ref[...] = jnp.zeros_like(acc_ref)

    acc_ref[...] += jnp.dot(
        x_ref[...], w_ref[...], preferred_element_type=jnp.float32
    )

    @pl.when(k == pl.num_programs(1) - 1)
    def _():
        o_ref[...] = jax.nn.sigmoid(acc_ref[...] + b_ref[0, 0]).astype(o_ref.dtype)


def ccs_probe_forward(activations, weight, bias):
    """activations: [N, D] (f32 or bf16), weight: [D], bias: scalar -> [N] f32."""
    n, d = activations.shape
    x_dtype = activations.dtype
    x_itemsize = jnp.dtype(x_dtype).itemsize

    tile_n, tile_k = _choose_tiles(n, d, x_itemsize)

    n_pad = _round_up(n, tile_n)
    d_pad = d if tile_k == d else _round_up(d, tile_k)

    # Pad rows (extra rows sliced off below) and, only when K-tiling, pad the
    # feature dim with zeros (zero weights -> no contribution to the logit).
    x = activations
    if n_pad != n or d_pad != d:
        x = jnp.pad(x, ((0, n_pad - n), (0, d_pad - d)))

    # Keep the weight in the activation dtype so the MXU runs the narrow path.
    w2d = weight.astype(x_dtype)
    if d_pad != d:
        w2d = jnp.pad(w2d, (0, d_pad - d))
    w2d = w2d.reshape(d_pad, 1)
    b2d = jnp.reshape(bias, (1, 1)).astype(jnp.float32)

    grid = (n_pad // tile_n, d_pad // tile_k)

    # Explicit VMEM budget: 2x (x tile + w tile) + 2x output tile + scratch,
    # plus slack.  Covers v5e's 16 MiB scoped default and stays under v7x's
    # 64 MiB physical VMEM.
    vmem_needed = (
        2 * (tile_n * tile_k + tile_k) * x_itemsize
        + 2 * tile_n * 4
        + tile_n * 4
    )
    vmem_limit = int(min(max(vmem_needed + (4 << 20), 32 << 20), 56 << 20))

    out = pl.pallas_call(
        _ccs_probe_kernel,
        out_shape=jax.ShapeDtypeStruct((n_pad, 1), jnp.float32),
        grid_spec=pltpu.PrefetchScalarGridSpec(
            num_scalar_prefetch=0,
            grid=grid,
            in_specs=[
                pl.BlockSpec((tile_n, tile_k), lambda i, k: (i, k)),
                pl.BlockSpec((tile_k, 1), lambda i, k: (k, 0)),
                pl.BlockSpec(memory_space=pltpu.MemorySpace.SMEM),
            ],
            out_specs=pl.BlockSpec((tile_n, 1), lambda i, k: (i, 0)),
            scratch_shapes=[pltpu.VMEM((tile_n, 1), jnp.float32)],
        ),
        compiler_params=pltpu.CompilerParams(
            dimension_semantics=("parallel", "arbitrary"),
            vmem_limit_bytes=vmem_limit,
        ),
        cost_estimate=pl.CostEstimate(
            flops=2 * n * d,
            transcendentals=n,
            bytes_accessed=n * d * x_itemsize + d * x_itemsize + n * 4,
        ),
    )(x, w2d, b2d)

    # squeeze(-1) in the PyTorch forward -> [N]; drop padded rows.
    return out[:n, 0]


if __name__ == "__main__":
    # Small shapes implied by the module: n samples, hidden_dim features.
    # N deliberately not a multiple of the sublane/tile size to exercise
    # the padding path.
    n, hidden_dim = 10, 32

    key = jax.random.PRNGKey(0)
    k_x, k_w, k_b = jax.random.split(key, 3)

    activations = jax.random.normal(k_x, (n, hidden_dim), dtype=jnp.float32)
    # Deterministic synthetic parameters (Linear(hidden_dim, 1)):
    weight = jax.random.normal(k_w, (hidden_dim,), dtype=jnp.float32) * 0.1
    bias = jax.random.normal(k_b, (), dtype=jnp.float32) * 0.1

    probs = jax.block_until_ready(ccs_probe_forward(activations, weight, bias))

    # Reference check in plain JAX (same math as torch.nn.Linear + sigmoid).
    ref = jax.nn.sigmoid(activations @ weight + bias)
    assert probs.shape == (n,)
    assert jnp.allclose(probs, ref, atol=1e-6, rtol=1e-6)

    # Narrow-dtype path: bf16 activations stream at half the HBM bytes.
    probs_bf16 = jax.block_until_ready(
        ccs_probe_forward(activations.astype(jnp.bfloat16), weight, bias)
    )
    assert probs_bf16.shape == (n,)
    assert jnp.allclose(probs_bf16, ref, atol=2e-2, rtol=2e-2)

    print("KERNEL_OK")
</pallas_src>

<mosaic_0001>
module attributes {stable_mosaic.version = 11 : i64} {
  func.func @_ccs_probe_kernel(%arg0: i32, %arg1: i32, %arg2: memref<16x32xf32, #tpu.memory_space<vmem>>, %arg3: memref<32x1xf32, #tpu.memory_space<vmem>>, %arg4: memref<1x1xf32, #tpu.memory_space<smem>>, %arg5: memref<16x1xf32, #tpu.memory_space<vmem>>, %arg6: memref<16x1xf32, #tpu.memory_space<vmem>>) attributes {dimension_semantics = [#tpu.dimension_semantics<parallel>, #tpu.dimension_semantics<arbitrary>], iteration_bounds = array<i64: 1, 1>, scalar_prefetch = 0 : i64, scratch_operands = 1 : i64, tpu.core_type = #tpu.core_type<tc>, window_params = [{transform_indices = @transform_0, window_bounds = array<i64: 16, 32>}, {transform_indices = @transform_1, window_bounds = array<i64: 32, 1>}, {transform_indices = @transform_2, window_bounds = array<i64: 1, 1>}, {transform_indices = @transform_3, window_bounds = array<i64: 16, 1>}]} {
    %c0_i32 = arith.constant 0 : i32
    %0 = arith.cmpi eq, %arg1, %c0_i32 : i32
    %1 = arith.extui %0 : i1 to i32
    %c0_i32_0 = arith.constant 0 : i32
    %2 = arith.cmpi ne, %1, %c0_i32_0 : i32
    scf.if %2 {
      %cst_10 = arith.constant 0.000000e+00 : f32
      %12 = vector.broadcast %cst_10 : f32 to vector<16x1xf32>
      %c0_11 = arith.constant 0 : index
      %c0_12 = arith.constant 0 : index
      %13 = vector.load %arg6[%c0_11, %c0_12] : memref<16x1xf32, #tpu.memory_space<vmem>>, vector<16x1xf32>
      tpu.vector_store %arg6[%c0_11, %c0_12], %12 {strides = array<i32>} : memref<16x1xf32, #tpu.memory_space<vmem>>, vector<16x1xf32>,
    } else {
    }
    %c0 = arith.constant 0 : index
    %c0_1 = arith.constant 0 : index
    %3 = vector.load %arg6[%c0, %c0_1] : memref<16x1xf32, #tpu.memory_space<vmem>>, vector<16x1xf32>
    %c0_2 = arith.constant 0 : index
    %c0_3 = arith.constant 0 : index
    %4 = vector.load %arg2[%c0_2, %c0_3] : memref<16x32xf32, #tpu.memory_space<vmem>>, vector<16x32xf32>
    %c0_4 = arith.constant 0 : index
    %c0_5 = arith.constant 0 : index
    %5 = vector.load %arg3[%c0_4, %c0_5] : memref<32x1xf32, #tpu.memory_space<vmem>>, vector<32x1xf32>
    %cst = arith.constant dense<0.000000e+00> : vector<16x1xf32>
    %6 = tpu.matmul %4, %5, %cst {dimension_numbers = #tpu.dot_dimension_numbers<[1], [0], [0], [1], [0, 0, 1, 1], [], []>} : vector<16x32xf32>, vector<32x1xf32>, vector<16x1xf32> -> vector<16x1xf32>
    %7 = arith.addf %3, %6 : vector<16x1xf32>
    %c0_6 = arith.constant 0 : index
    %c0_7 = arith.constant 0 : index
    %8 = vector.load %arg6[%c0_6, %c0_7] : memref<16x1xf32, #tpu.memory_space<vmem>>, vector<16x1xf32>
    tpu.vector_store %arg6[%c0_6, %c0_7], %7 {strides = array<i32>} : memref<16x1xf32, #tpu.memory_space<vmem>>, vector<16x1xf32>,
    %c0_i32_8 = arith.constant 0 : i32
    %9 = arith.cmpi eq, %arg1, %c0_i32_8 : i32
    %10 = arith.extui %9 : i1 to i32
    %c0_i32_9 = arith.constant 0 : i32
    %11 = arith.cmpi ne, %10, %c0_i32_9 : i32
    scf.if %11 {
      %c0_10 = arith.constant 0 : index
      %c0_11 = arith.constant 0 : index
      %12 = vector.load %arg6[%c0_10, %c0_11] : memref<16x1xf32, #tpu.memory_space<vmem>>, vector<16x1xf32>
      %c0_12 = arith.constant 0 : index
      %c0_13 = arith.constant 0 : index
      %13 = memref.load %arg4[%c0_12, %c0_13] : memref<1x1xf32, #tpu.memory_space<smem>>
      %14 = vector.broadcast %13 : f32 to vector<16x1xf32>
      %15 = arith.addf %12, %14 : vector<16x1xf32>
      %16 = arith.negf %15 : vector<16x1xf32>
      %17 = math.exp %16 : vector<16x1xf32>
      %cst_14 = arith.constant 1.000000e+00 : f32
      %18 = vector.broadcast %cst_14 : f32 to vector<16x1xf32>
      %19 = arith.addf %18, %17 : vector<16x1xf32>
      %20 = arith.divf %18, %19 : vector<16x1xf32>
      %c0_15 = arith.constant 0 : index
      %c0_16 = arith.constant 0 : index
      %21 = vector.load %arg5[%c0_15, %c0_16] : memref<16x1xf32, #tpu.memory_space<vmem>>, vector<16x1xf32>
      tpu.vector_store %arg5[%c0_15, %c0_16], %20 {strides = array<i32>} : memref<16x1xf32, #tpu.memory_space<vmem>>, vector<16x1xf32>,
    } else {
    }
    return
  }
  func.func @transform_0(%arg0: i32, %arg1: i32) -> (i32, i32) {
    %c0_i32 = arith.constant 0 : i32
    return %arg0, %arg1 : i32, i32
  }
  func.func @transform_1(%arg0: i32, %arg1: i32) -> (i32, i32) {
    %c0_i32 = arith.constant 0 : i32
    %c0_i32_0 = arith.constant 0 : i32
    return %arg1, %c0_i32 : i32, i32
  }
  func.func @transform_2(%arg0: i32, %arg1: i32) -> (i32, i32) {
    %c0_i32 = arith.constant 0 : i32
    %c0_i32_0 = arith.constant 0 : i32
    %c0_i32_1 = arith.constant 0 : i32
    return %c0_i32, %c0_i32_0 : i32, i32
  }
  func.func @transform_3(%arg0: i32, %arg1: i32) -> (i32, i32) {
    %c0_i32 = arith.constant 0 : i32
    %c0_i32_0 = arith.constant 0 : i32
    return %arg0, %c0_i32 : i32, i32
  }
}

</mosaic_0001>

<llo_original>
// kernel: tpu_custom_call.1
$region0: #{tpu_custom_call.1}
  #allocation0 [shape = 'u32[]', space=smem, size = 0x4, offset = 0x4, fixed_abs, tag = 'smem constant byte address 0x4 - core index']
  #allocation1 [shape = 'u32[144,128]{1,0:T(1,128)}', space=vmem, size = 0x12000, scoped, tag = 'internal scratch']
  #allocation2 [shape = 'f32[16,1]{1,0:T(8,128)}', space=vmem, size = 0x2000, scoped, tag = 'scratch operand']
  #allocation3 [shape = 'f32[1,1]{1,0:T(1,128)S(6)}', space=smem, size = 0x200, scoped, tag = 'scoped memory for tpu_custom_call.1']
  %s0 = inlined_call_operand.vmem [shape: f32[16,32], index: 0, kind: input, shape index: {}]
  %s1 = inlined_call_operand.vmem [shape: f32[32,1], index: 1, kind: input, shape index: {}]
  %s2 = inlined_call_operand.<no memory space> [shape: f32[1,1], index: 2, kind: input, shape index: {}]
  %s3 = inlined_call_operand.vmem [shape: f32[16,1], index: 3, kind: output, shape index: {}]
  %s4 = sld [smem:[#allocation0]]
  $region30: #{tpu_custom_call.1} parent=0
    _
  %s6 = ssub.s32 1, %s4
  %s7 = scalar_select 0, %s6, %s4
  %8 = sst [smem:[#allocation3]] %s2
  // Predicated region
  $region2: #{tpu_custom_call.1} parent=0 // pred_check
    _
  $region3: #{tpu_custom_call.1} parent=0 // pred_check_branch
    %10 = sbr.rel (0) target = $region5
  $region4: #{tpu_custom_call.1} parent=0 // pred_region
    _
  $region5: #{tpu_custom_call.1} parent=0 // pred_fallthru
    _
  // Predicated region
  $region6: #{tpu_custom_call.1} parent=0 // pred_check
    _
  $region7: #{tpu_custom_call.1} parent=0 // pred_check_branch
    %12 = sbr.rel (0) target = $region9
  $region8: #{tpu_custom_call.1} parent=0 // pred_region
    _
  $region9: #{tpu_custom_call.1} parent=0 // pred_fallthru
    _
  // Predicated region
  $region10: #{tpu_custom_call.1} parent=0 // pred_check
    _
  $region11: #{tpu_custom_call.1} parent=0 // pred_check_branch
    %14 = sbr.rel (0) target = $region13
  $region12: #{tpu_custom_call.1} parent=0 // pred_region
    _
  $region13: #{tpu_custom_call.1} parent=0 // pred_fallthru
    _
  %p15 = scmp.eq.s32.totalorder 0, 0
  // Predicated region
  $region14: #{tpu_custom_call.1} parent=0 // pred_check
    %p16 = pneg %p15
  $region15: #{tpu_custom_call.1} parent=0 // pred_check_branch
    %18 = sbr.rel (%p16) target = $region17
  $region16: #{tpu_custom_call.1} parent=0 // pred_region
    %vm19 = vcmask 7168
    %20 = vst.msk [vmem:[#allocation2] sm:$0xff] %vm19, 0.0
    %21 = vst.msk [vmem:[#allocation2 + $0x8] sm:$0xff] %vm19, 0.0
  $region17: #{tpu_custom_call.1} parent=0 // pred_fallthru
    _
  %v22 = vld [vmem:[#allocation2] sm:$0xff]
  %v23 = vld [vmem:[#allocation2 + $0x8] sm:$0xff]
  %v24 = vld [vmem:[%s0] sm:$0xff]
  %v25 = vld [vmem:[%s0 + $0x8] sm:$0xff]
  %v26 = vld [vmem:[%s1] sm:$0xff]
  %v27 = vld [vmem:[%s1 + $0x8] sm:$0xff]
  %v28 = vld [vmem:[%s1 + $0x10] sm:$0xff]
  %v29 = vld [vmem:[%s1 + $0x18] sm:$0xff]
  %vm30 = vcmask 261120
  %v32 = vsel %vm30, %v24, 0
  %v35 = vsel %vm30, %v25, 0
  %37 = vmatprep.subr.mxu0 0.0
  %38 = vmatpush1.msra.mxu0 %v26
  %39 = vmatprep.subr.mxu0 0.0
  %40 = vmatpush1.msra.mxu0 %v27
  %41 = vmatprep.subr.mxu0 0.0
  %42 = vmatpush1.msra.mxu0 %v28
  %43 = vmatprep.subr.mxu0 0.0
  %44 = vmatpush1.msra.mxu0 %v29
  %45 = vmatprep.subr.mxu0 0.0
  %46 = vmatpush1.msra.mxu0 0.0
  %47 = vmatprep.subr.mxu0 0.0
  %48 = vmatpush1.msra.mxu0 0.0
  %49 = vmatprep.subr.mxu0 0.0
  %50 = vmatpush1.msra.mxu0 0.0
  %51 = vmatprep.subr.mxu0 0.0
  %52 = vmatpush1.msra.mxu0 0.0
  %53 = vmatprep.subr.mxu0 0.0
  %54 = vmatpush1.msra.mxu0 0.0
  %55 = vmatprep.subr.mxu0 0.0
  %56 = vmatpush1.msra.mxu0 0.0
  %57 = vmatprep.subr.mxu0 0.0
  %58 = vmatpush1.msra.mxu0 0.0
  %59 = vmatprep.subr.mxu0 0.0
  %60 = vmatpush1.msra.mxu0 0.0
  %61 = vmatprep.subr.mxu0 0.0
  %62 = vmatpush1.msra.mxu0 0.0
  %63 = vmatprep.subr.mxu0 0.0
  %64 = vmatpush1.msra.mxu0 0.0
  %65 = vmatprep.subr.mxu0 0.0
  %66 = vmatpush1.msra.mxu0 0.0
  %67 = vmatprep.subr.mxu0 0.0
  %68 = vmatpush1.msra.mxu0 0.0
  %69 = vmatprep.subr.mxu0 0.0
  %70 = vmatpush1.msra.mxu0 0.0
  %71 = vmatprep.subr.mxu0 0.0
  %72 = vmatpush1.msra.mxu0 0.0
  %73 = vmatprep.subr.mxu0 0.0
  %74 = vmatpush1.msra.mxu0 0.0
  %75 = vmatprep.subr.mxu0 0.0
  %76 = vmatpush1.msra.mxu0 0.0
  %77 = vmatprep.subr.mxu0 0.0
  %78 = vmatpush1.msra.mxu0 0.0
  %79 = vmatprep.subr.mxu0 0.0
  %80 = vmatpush1.msra.mxu0 0.0
  %81 = vmatprep.subr.mxu0 0.0
  %82 = vmatpush1.msra.mxu0 0.0
  %83 = vmatprep.subr.mxu0 0.0
  %84 = vmatpush1.msra.mxu0 0.0
  %85 = vmatprep.subr.mxu0 0.0
  %86 = vmatpush1.msra.mxu0 0.0
  %87 = vmatprep.subr.mxu0 0.0
  %88 = vmatpush1.msra.mxu0 0.0
  %89 = vmatprep.subr.mxu0 0.0
  %90 = vmatpush1.msra.mxu0 0.0
  %91 = vmatprep.subr.mxu0 0.0
  %92 = vmatpush1.msra.mxu0 0.0
  %93 = vmatprep.subr.mxu0 0.0
  %94 = vmatpush1.msra.mxu0 0.0
  %95 = vmatprep.subr.mxu0 0.0
  %96 = vmatpush1.msra.mxu0 0.0
  %97 = vmatprep.subr.mxu0 0.0
  %98 = vmatpush1.msra.mxu0 0.0
  %99 = vmatprep.subr.mxu0 0.0
  %100 = vmatpush1.msra.mxu0 0.0
  %101 = vmatprep.mubr.f32.mxu0 0.0
  %102 = vmatmul.mubr.f32.gmra.mrb[0].mxu0 %v32
  %v103 = vpop.f32.mrb[0].mxu0
  %v104 = vadd.f32 0.0, %v103
  %v105 = vpop.f32.mrb[0].mxu0
  %106 = vmatprep.mubr.f32.mxu0 0.0
  %107 = vmatmul.mubr.f32.gmra.mrb[0].mxu0 %v35
  %v108 = vpop.f32.mrb[0].mxu0
  %v109 = vadd.f32 0.0, %v108
  %v110 = vpop.f32.mrb[0].mxu0
  %111 = vdwg.mxu0
  %v112 = vadd.f32 %v22, %v104
  %v113 = vadd.f32 %v23, %v109
  %vm114 = vcmask 7168
  %115 = vst.msk [vmem:[#allocation2] sm:$0xff] %vm114, %v112
  %116 = vst.msk [vmem:[#allocation2 + $0x8] sm:$0xff] %vm114, %v113
  // Predicated region
  $region18: #{tpu_custom_call.1} parent=0 // pred_check
    %p117 = pneg %p15
  $region19: #{tpu_custom_call.1} parent=0 // pred_check_branch
    %119 = sbr.rel (%p117) target = $region21
  $region20: #{tpu_custom_call.1} parent=0 // pred_region
    %v120 = vld [vmem:[#allocation2] sm:$0xff]
    %v121 = vld [vmem:[#allocation2 + $0x8] sm:$0xff]
    %s122 = sld [smem:[#allocation3]]
    %v123 = vstv %s122
    %v124 = vadd.f32 %v120, %v123
    %v125 = vadd.f32 %v121, %v123
    %v126 = vxor.u32 %v124, 2147483648
    %v127 = vxor.u32 %v125, 2147483648
    %v128 = vmul.f32 %v126, 1.442695
    %v129 = vpow.pop %v128
    %v130 = vmul.f32 %v127, 1.442695
    %v131 = vpow.pop %v130
    %v132 = vadd.f32 %v129, 1.0
    %v133 = vadd.f32 %v131, 1.0
    %v134 = vrcp.pop %v132
    %v135 = vmul.f32 1.0, %v134
    %v136 = vrcp.pop %v133
    %v137 = vmul.f32 1.0, %v136
    %138 = vst.msk [vmem:[%s3] sm:$0xff] %vm114, %v135
    %139 = vst.msk [vmem:[%s3 + $0x8] sm:$0xff] %vm114, %v137
  $region21: #{tpu_custom_call.1} parent=0 // pred_fallthru
    _
  // Predicated region
  $region22: #{tpu_custom_call.1} parent=0 // pred_check
    _
  $region23: #{tpu_custom_call.1} parent=0 // pred_check_branch
    %141 = sbr.rel (0) target = $region25
  $region24: #{tpu_custom_call.1} parent=0 // pred_region
    _
  $region25: #{tpu_custom_call.1} parent=0 // pred_fallthru
    _
  // Predicated region
  $region26: #{tpu_custom_call.1} parent=0 // pred_check
    _
  $region27: #{tpu_custom_call.1} parent=0 // pred_check_branch
    %143 = sbr.rel (0) target = $region29
  $region28: #{tpu_custom_call.1} parent=0 // pred_region
    _
  $region29: #{tpu_custom_call.1} parent=0 // pred_fallthru
    _

</llo_original>
